<compile_context>
chip_gen: v5e
topology: v5e:2x2
jax: 0.10.0
libtpu: 0.0.40
codegen_flags: <defaults>
</compile_context>

<pallas_src>
import functools

import jax
import jax.numpy as jnp
from jax import lax
from jax.experimental import pallas as pl
from jax.experimental.pallas import tpu as pltpu


def _mlp_kernel(x_ref, w1_ref, b1_ref, w2_ref, b2_ref, w3_ref, b3_ref, o_ref):
    # x tile is in native (block_b, F) layout; contract the F axis of both
    # operands so the result is (H1, block_b) -- batch stays on the lane axis.
    h1 = lax.dot_general(
        w1_ref[...], x_ref[...],
        dimension_numbers=(((1,), (1,)), ((), ())),
        preferred_element_type=jnp.float32,
    ) + b1_ref[...]
    h1 = jnp.maximum(h1, 0.0)

    # fc2 + ReLU : (H2, H1) @ (H1, block_b) -> (H2, block_b).
    # astype is a no-op on the f32 path; casts h1 to bf16 on the bf16 path.
    h2 = jnp.dot(w2_ref[...], h1.astype(w2_ref.dtype),
                 preferred_element_type=jnp.float32) + b2_ref[...]
    h2 = jnp.maximum(h2, 0.0)

    # fc3 + ReLU : 72 -> 1 as VPU multiply + sublane (XLU) reduction; result is
    # a lane-dense (1, block_b) slab (unmasked vst), no transpose needed.
    y = jnp.sum(h2 * w3_ref[...], axis=0, keepdims=True) + b3_ref[...]
    o_ref[...] = jnp.maximum(y, 0.0).astype(o_ref.dtype)


def _round_up(n, m):
    return -(-n // m) * m


@functools.partial(jax.jit, static_argnames=("block_b", "use_bf16"))
def regressor_forward(x, params, *, block_b=1024, use_bf16=False):
    """Forward pass of Regressor.  x: (B, n_features) f32 -> (B, 1) f32.

    `params` are in PyTorch layout: w_i (out_features, in_features), b_i (out_features,).
    """
    w1, b1, w2, b2, w3, b3 = params
    B, F = x.shape
    H1 = w1.shape[0]   # 144
    H2 = w2.shape[0]   # 72

    # Batch tile: multiple of 128 (lane width), no bigger than the batch needs.
    block_b = max(128, _round_up(min(block_b, B), 128))
    # v7x has 2 TensorCores and the batch axis is the only shardable one: make
    # sure the grid has at least two (ideally even) steps when B allows it.
    if B > 128:
        block_b = min(block_b, _round_up(pl.cdiv(B, 2), 128))
    grid_b = pl.cdiv(B, block_b)
    b_pad = grid_b * block_b

    # Only pad the remainder of the batch (no transpose, no full re-write of x).
    x_in = x if b_pad == B else jnp.pad(x, ((0, b_pad - B), (0, 0)))

    compute_dtype = jnp.bfloat16 if use_bf16 else x.dtype
    x_in = x_in.astype(compute_dtype)
    w1c = w1.astype(compute_dtype)
    w2c = w2.astype(compute_dtype)

    # Column-vector biases / final weight for the (features, batch) layout.
    b1c = b1.reshape(H1, 1).astype(jnp.float32)
    b2c = b2.reshape(H2, 1).astype(jnp.float32)
    w3c = w3.reshape(H2, 1).astype(jnp.float32)   # (1, 72) -> (72, 1)
    b3c = b3.reshape(1, 1).astype(jnp.float32)

    out = pl.pallas_call(
        _mlp_kernel,
        out_shape=jax.ShapeDtypeStruct((1, b_pad), jnp.float32),
        grid=(grid_b,),
        in_specs=[
            pl.BlockSpec((block_b, F), lambda i: (i, 0)),   # streamed x tile (native layout)
            pl.BlockSpec((H1, F), lambda i: (0, 0)),        # w1 (resident)
            pl.BlockSpec((H1, 1), lambda i: (0, 0)),        # b1
            pl.BlockSpec((H2, H1), lambda i: (0, 0)),       # w2
            pl.BlockSpec((H2, 1), lambda i: (0, 0)),        # b2
            pl.BlockSpec((H2, 1), lambda i: (0, 0)),        # w3 column
            pl.BlockSpec((1, 1), lambda i: (0, 0)),         # b3
        ],
        out_specs=pl.BlockSpec((1, block_b), lambda i: (0, i)),
        compiler_params=pltpu.CompilerParams(
            dimension_semantics=("parallel",),   # batch axis shards across TCs on v7x
        ),
    )(x_in, w1c, b1c, w2c, b2c, w3c, b3c)

    return out.reshape(b_pad, 1)[:B]


def init_params(key, n_features):
    """nn.Linear default init: U(-1/sqrt(fan_in), +1/sqrt(fan_in)); PyTorch layout."""
    sizes = [(144, n_features), (72, 144), (1, 72)]   # (out, in)
    params = []
    for fan_out, fan_in in sizes:
        key, kw, kb = jax.random.split(key, 3)
        bound = 1.0 / float(fan_in) ** 0.5
        w = jax.random.uniform(kw, (fan_out, fan_in), jnp.float32, -bound, bound)
        b = jax.random.uniform(kb, (fan_out,), jnp.float32, -bound, bound)
        params.extend([w, b])
    return tuple(params)


def reference_forward(x, params):
    w1, b1, w2, b2, w3, b3 = params
    hi = jax.lax.Precision.HIGHEST
    h = jnp.maximum(jnp.dot(x, w1.T, precision=hi) + b1, 0.0)
    h = jnp.maximum(jnp.dot(h, w2.T, precision=hi) + b2, 0.0)
    h = jnp.maximum(jnp.dot(h, w3.T, precision=hi) + b3, 0.0)
    return h


if __name__ == "__main__":
    key = jax.random.PRNGKey(0)
    n_features = 32   # input_size = n_features

    k_params, k_x1, k_x2 = jax.random.split(key, 3)
    params = init_params(k_params, n_features)

    # Small batch (single grid step).
    x_small = jax.random.normal(k_x1, (16, n_features), jnp.float32)
    out_small = jax.block_until_ready(regressor_forward(x_small, params))
    ref_small = reference_forward(x_small, params)
    assert out_small.shape == (16, 1), out_small.shape
    assert jnp.allclose(out_small, ref_small, atol=5e-5, rtol=5e-5), "small-batch mismatch"

    # Larger batch: exercises a multi-step grid (>= 2 steps so both v7x TCs get
    # work) and the remainder padding path.
    x_big = jax.random.normal(k_x2, (300, n_features), jnp.float32)
    out_big = jax.block_until_ready(regressor_forward(x_big, params))
    ref_big = reference_forward(x_big, params)
    assert out_big.shape == (300, 1), out_big.shape
    assert jnp.allclose(out_big, ref_big, atol=5e-5, rtol=5e-5), "big-batch mismatch"

    # Optional bf16 matmul path (f32 accumulation): looser tolerance by design.
    out_bf16 = jax.block_until_ready(regressor_forward(x_big, params, use_bf16=True))
    assert out_bf16.shape == (300, 1), out_bf16.shape
    assert jnp.allclose(out_bf16, ref_big, atol=5e-2, rtol=5e-2), "bf16-path mismatch"

    print("KERNEL_OK")
</pallas_src>

<mosaic_0001>
module attributes {stable_mosaic.version = 11 : i64} {
  func.func @_mlp_kernel(%arg0: i32, %arg1: memref<128x32xf32, #tpu.memory_space<vmem>>, %arg2: memref<144x32xf32, #tpu.memory_space<vmem>>, %arg3: memref<144x1xf32, #tpu.memory_space<vmem>>, %arg4: memref<72x144xf32, #tpu.memory_space<vmem>>, %arg5: memref<72x1xf32, #tpu.memory_space<vmem>>, %arg6: memref<72x1xf32, #tpu.memory_space<vmem>>, %arg7: memref<1x1xf32, #tpu.memory_space<vmem>>, %arg8: memref<1x128xf32, #tpu.memory_space<vmem>>) attributes {dimension_semantics = [#tpu.dimension_semantics<parallel>], iteration_bounds = array<i64: 1>, scalar_prefetch = 0 : i64, scratch_operands = 0 : i64, tpu.core_type = #tpu.core_type<tc>, window_params = [{transform_indices = @transform_0, window_bounds = array<i64: 128, 32>}, {pipeline_mode = #tpu.pipeline_mode<synchronous>, transform_indices = @transform_1, window_bounds = array<i64: 144, 32>}, {pipeline_mode = #tpu.pipeline_mode<synchronous>, transform_indices = @transform_2, window_bounds = array<i64: 144, 1>}, {pipeline_mode = #tpu.pipeline_mode<synchronous>, transform_indices = @transform_3, window_bounds = array<i64: 72, 144>}, {pipeline_mode = #tpu.pipeline_mode<synchronous>, transform_indices = @transform_4, window_bounds = array<i64: 72, 1>}, {pipeline_mode = #tpu.pipeline_mode<synchronous>, transform_indices = @transform_5, window_bounds = array<i64: 72, 1>}, {pipeline_mode = #tpu.pipeline_mode<synchronous>, transform_indices = @transform_6, window_bounds = array<i64: 1, 1>}, {transform_indices = @transform_7, window_bounds = array<i64: 1, 128>}]} {
    %c0 = arith.constant 0 : index
    %c0_0 = arith.constant 0 : index
    %0 = vector.load %arg2[%c0, %c0_0] : memref<144x32xf32, #tpu.memory_space<vmem>>, vector<144x32xf32>
    %c0_1 = arith.constant 0 : index
    %c0_2 = arith.constant 0 : index
    %1 = vector.load %arg1[%c0_1, %c0_2] : memref<128x32xf32, #tpu.memory_space<vmem>>, vector<128x32xf32>
    %cst = arith.constant dense<0.000000e+00> : vector<144x128xf32>
    %2 = tpu.matmul %0, %1, %cst {dimension_numbers = #tpu.dot_dimension_numbers<[1], [1], [0], [0], [0, 0, 1, 0], [], []>} : vector<144x32xf32>, vector<128x32xf32>, vector<144x128xf32> -> vector<144x128xf32>
    %c0_3 = arith.constant 0 : index
    %c0_4 = arith.constant 0 : index
    %3 = vector.load %arg3[%c0_3, %c0_4] : memref<144x1xf32, #tpu.memory_space<vmem>>, vector<144x1xf32>
    %4 = vector.broadcast %3 : vector<144x1xf32> to vector<144x128xf32>
    %5 = arith.addf %2, %4 : vector<144x128xf32>
    %cst_5 = arith.constant 0.000000e+00 : f32
    %6 = vector.broadcast %cst_5 : f32 to vector<144x128xf32>
    %7 = arith.maximumf %5, %6 : vector<144x128xf32>
    %c0_6 = arith.constant 0 : index
    %c0_7 = arith.constant 0 : index
    %8 = vector.load %arg4[%c0_6, %c0_7] : memref<72x144xf32, #tpu.memory_space<vmem>>, vector<72x144xf32>
    %cst_8 = arith.constant dense<0.000000e+00> : vector<72x128xf32>
    %9 = tpu.matmul %8, %7, %cst_8 {dimension_numbers = #tpu.dot_dimension_numbers<[1], [0], [0], [1], [0, 0, 1, 1], [], []>} : vector<72x144xf32>, vector<144x128xf32>, vector<72x128xf32> -> vector<72x128xf32>
    %c0_9 = arith.constant 0 : index
    %c0_10 = arith.constant 0 : index
    %10 = vector.load %arg5[%c0_9, %c0_10] : memref<72x1xf32, #tpu.memory_space<vmem>>, vector<72x1xf32>
    %11 = vector.broadcast %10 : vector<72x1xf32> to vector<72x128xf32>
    %12 = arith.addf %9, %11 : vector<72x128xf32>
    %cst_11 = arith.constant 0.000000e+00 : f32
    %13 = vector.broadcast %cst_11 : f32 to vector<72x128xf32>
    %14 = arith.maximumf %12, %13 : vector<72x128xf32>
    %c0_12 = arith.constant 0 : index
    %c0_13 = arith.constant 0 : index
    %15 = vector.load %arg6[%c0_12, %c0_13] : memref<72x1xf32, #tpu.memory_space<vmem>>, vector<72x1xf32>
    %16 = vector.broadcast %15 : vector<72x1xf32> to vector<72x128xf32>
    %17 = arith.mulf %14, %16 : vector<72x128xf32>
    %cst_14 = arith.constant dense<0.000000e+00> : vector<128xf32>
    %18 = vector.multi_reduction <add>, %17, %cst_14 [0] : vector<72x128xf32> to vector<128xf32>
    %19 = vector.shape_cast %18 : vector<128xf32> to vector<1x128xf32>
    %c0_15 = arith.constant 0 : index
    %c0_16 = arith.constant 0 : index
    %20 = vector.load %arg7[%c0_15, %c0_16] : memref<1x1xf32, #tpu.memory_space<vmem>>, vector<1x1xf32>
    %21 = vector.broadcast %20 : vector<1x1xf32> to vector<1x128xf32>
    %22 = arith.addf %19, %21 : vector<1x128xf32>
    %cst_17 = arith.constant 0.000000e+00 : f32
    %23 = vector.broadcast %cst_17 : f32 to vector<1x128xf32>
    %24 = arith.maximumf %22, %23 : vector<1x128xf32>
    %c0_18 = arith.constant 0 : index
    %c0_19 = arith.constant 0 : index
    %25 = vector.load %arg8[%c0_18, %c0_19] : memref<1x128xf32, #tpu.memory_space<vmem>>, vector<1x128xf32>
    tpu.vector_store %arg8[%c0_18, %c0_19], %24 {strides = array<i32>} : memref<1x128xf32, #tpu.memory_space<vmem>>, vector<1x128xf32>,
    return
  }
  func.func @transform_0(%arg0: i32) -> (i32, i32) {
    %c0_i32 = arith.constant 0 : i32
    %c0_i32_0 = arith.constant 0 : i32
    return %arg0, %c0_i32 : i32, i32
  }
  func.func @transform_1(%arg0: i32) -> (i32, i32) {
    %c0_i32 = arith.constant 0 : i32
    %c0_i32_0 = arith.constant 0 : i32
    %c0_i32_1 = arith.constant 0 : i32
    return %c0_i32, %c0_i32_0 : i32, i32
  }
  func.func @transform_2(%arg0: i32) -> (i32, i32) {
    %c0_i32 = arith.constant 0 : i32
    %c0_i32_0 = arith.constant 0 : i32
    %c0_i32_1 = arith.constant 0 : i32
    return %c0_i32, %c0_i32_0 : i32, i32
  }
  func.func @transform_3(%arg0: i32) -> (i32, i32) {
    %c0_i32 = arith.constant 0 : i32
    %c0_i32_0 = arith.constant 0 : i32
    %c0_i32_1 = arith.constant 0 : i32
    return %c0_i32, %c0_i32_0 : i32, i32
  }
  func.func @transform_4(%arg0: i32) -> (i32, i32) {
    %c0_i32 = arith.constant 0 : i32
    %c0_i32_0 = arith.constant 0 : i32
    %c0_i32_1 = arith.constant 0 : i32
    return %c0_i32, %c0_i32_0 : i32, i32
  }
  func.func @transform_5(%arg0: i32) -> (i32, i32) {
    %c0_i32 = arith.constant 0 : i32
    %c0_i32_0 = arith.constant 0 : i32
    %c0_i32_1 = arith.constant 0 : i32
    return %c0_i32, %c0_i32_0 : i32, i32
  }
  func.func @transform_6(%arg0: i32) -> (i32, i32) {
    %c0_i32 = arith.constant 0 : i32
    %c0_i32_0 = arith.constant 0 : i32
    %c0_i32_1 = arith.constant 0 : i32
    return %c0_i32, %c0_i32_0 : i32, i32
  }
  func.func @transform_7(%arg0: i32) -> (i32, i32) {
    %c0_i32 = arith.constant 0 : i32
    %c0_i32_0 = arith.constant 0 : i32
    return %c0_i32, %arg0 : i32, i32
  }
}

</mosaic_0001>

<llo_original>
// kernel: regressor_forward.1
$region0: #{regressor_forward.1}
  #allocation0 [shape = 'u32[]', space=smem, size = 0x4, offset = 0x4, fixed_abs, tag = 'smem constant byte address 0x4 - core index']
  #allocation1 [shape = 'u32[72,128]{1,0:T(1,128)}', space=vmem, size = 0x9000, scoped, tag = 'internal scratch']
  #allocation2 [shape = 'f32[1,1]{1,0:T(1,128)S(1)}', space=vmem, size = 0x200, scoped, tag = 'scoped memory for regressor_forward.1']
  %s0 = inlined_call_operand.vmem [shape: f32[128,32], index: 0, kind: input, shape index: {}]
  %s1 = inlined_call_operand.vmem [shape: f32[144,32], index: 1, kind: input, shape index: {}]
  %s2 = inlined_call_operand.vmem [shape: f32[144,1], index: 2, kind: input, shape index: {}]
  %s3 = inlined_call_operand.vmem [shape: f32[72,144], index: 3, kind: input, shape index: {}]
  %s4 = inlined_call_operand.vmem [shape: f32[72,1], index: 4, kind: input, shape index: {}]
  %s5 = inlined_call_operand.vmem [shape: f32[72,1], index: 5, kind: input, shape index: {}]
  %s6 = inlined_call_operand.<no memory space> [shape: f32[1,1], index: 6, kind: input, shape index: {}]
  %s7 = inlined_call_operand.vmem [shape: f32[1,128], index: 7, kind: output, shape index: {}]
  %s8 = sld [smem:[#allocation0]]
  $region38: #{regressor_forward.1} parent=0
    _
  %s10 = ssub.s32 1, %s8
  %s11 = scalar_select 0, %s10, %s8
  %v12 = vstv %s6
  %13 = vst [vmem:[#allocation2] sm:$0x1] %v12
  // Predicated region
  $region2: #{regressor_forward.1} parent=0 // pred_check
    _
  $region3: #{regressor_forward.1} parent=0 // pred_check_branch
    %15 = sbr.rel (0) target = $region5
  $region4: #{regressor_forward.1} parent=0 // pred_region
    _
  $region5: #{regressor_forward.1} parent=0 // pred_fallthru
    _
  // Predicated region
  $region6: #{regressor_forward.1} parent=0 // pred_check
    _
  $region7: #{regressor_forward.1} parent=0 // pred_check_branch
    %17 = sbr.rel (0) target = $region9
  $region8: #{regressor_forward.1} parent=0 // pred_region
    _
  $region9: #{regressor_forward.1} parent=0 // pred_fallthru
    _
  // Predicated region
  $region10: #{regressor_forward.1} parent=0 // pred_check
    _
  $region11: #{regressor_forward.1} parent=0 // pred_check_branch
    %19 = sbr.rel (0) target = $region13
  $region12: #{regressor_forward.1} parent=0 // pred_region
    _
  $region13: #{regressor_forward.1} parent=0 // pred_fallthru
    _
  // Predicated region
  $region14: #{regressor_forward.1} parent=0 // pred_check
    _
  $region15: #{regressor_forward.1} parent=0 // pred_check_branch
    %21 = sbr.rel (0) target = $region17
  $region16: #{regressor_forward.1} parent=0 // pred_region
    _
  $region17: #{regressor_forward.1} parent=0 // pred_fallthru
    _
  // Predicated region
  $region18: #{regressor_forward.1} parent=0 // pred_check
    _
  $region19: #{regressor_forward.1} parent=0 // pred_check_branch
    %23 = sbr.rel (0) target = $region21
  $region20: #{regressor_forward.1} parent=0 // pred_region
    _
  $region21: #{regressor_forward.1} parent=0 // pred_fallthru
    _
  // Predicated region
  $region22: #{regressor_forward.1} parent=0 // pred_check
    _
  $region23: #{regressor_forward.1} parent=0 // pred_check_branch
    %25 = sbr.rel (0) target = $region25
  $region24: #{regressor_forward.1} parent=0 // pred_region
    _
  $region25: #{regressor_forward.1} parent=0 // pred_fallthru
    _
  // Predicated region
  $region26: #{regressor_forward.1} parent=0 // pred_check
    _
  $region27: #{regressor_forward.1} parent=0 // pred_check_branch
    %27 = sbr.rel (0) target = $region29
  $region28: #{regressor_forward.1} parent=0 // pred_region
    _
  $region29: #{regressor_forward.1} parent=0 // pred_fallthru
    _
  %v28 = vld [vmem:[%s1] sm:$0xff]
  %v29 = vld [vmem:[%s1 + $0x8] sm:$0xff]
  %v30 = vld [vmem:[%s1 + $0x10] sm:$0xff]
  %v31 = vld [vmem:[%s1 + $0x18] sm:$0xff]
  %v32 = vld [vmem:[%s1 + $0x20] sm:$0xff]
  %v33 = vld [vmem:[%s1 + $0x28] sm:$0xff]
  %v34 = vld [vmem:[%s1 + $0x30] sm:$0xff]
  %v35 = vld [vmem:[%s1 + $0x38] sm:$0xff]
  %v36 = vld [vmem:[%s1 + $0x40] sm:$0xff]
  %v37 = vld [vmem:[%s1 + $0x48] sm:$0xff]
  %v38 = vld [vmem:[%s1 + $0x50] sm:$0xff]
  %v39 = vld [vmem:[%s1 + $0x58] sm:$0xff]
  %v40 = vld [vmem:[%s1 + $0x60] sm:$0xff]
  %v41 = vld [vmem:[%s1 + $0x68] sm:$0xff]
  %v42 = vld [vmem:[%s1 + $0x70] sm:$0xff]
  %v43 = vld [vmem:[%s1 + $0x78] sm:$0xff]
  %v44 = vld [vmem:[%s1 + $0x80] sm:$0xff]
  %v45 = vld [vmem:[%s1 + $0x88] sm:$0xff]
  %v46 = vld [vmem:[%s0] sm:$0xff]
  %v47 = vld [vmem:[%s0 + $0x8] sm:$0xff]
  %v48 = vld [vmem:[%s0 + $0x10] sm:$0xff]
  %v49 = vld [vmem:[%s0 + $0x18] sm:$0xff]
  %v50 = vld [vmem:[%s0 + $0x20] sm:$0xff]
  %v51 = vld [vmem:[%s0 + $0x28] sm:$0xff]
  %v52 = vld [vmem:[%s0 + $0x30] sm:$0xff]
  %v53 = vld [vmem:[%s0 + $0x38] sm:$0xff]
  %v54 = vld [vmem:[%s0 + $0x40] sm:$0xff]
  %v55 = vld [vmem:[%s0 + $0x48] sm:$0xff]
  %v56 = vld [vmem:[%s0 + $0x50] sm:$0xff]
  %v57 = vld [vmem:[%s0 + $0x58] sm:$0xff]
  %v58 = vld [vmem:[%s0 + $0x60] sm:$0xff]
  %v59 = vld [vmem:[%s0 + $0x68] sm:$0xff]
  %v60 = vld [vmem:[%s0 + $0x70] sm:$0xff]
  %v61 = vld [vmem:[%s0 + $0x78] sm:$0xff]
  %v62 = vld [vmem:[%s2] sm:$0xff]
  %v63 = vld [vmem:[%s2 + $0x8] sm:$0xff]
  %v64 = vld [vmem:[%s2 + $0x10] sm:$0xff]
  %v65 = vld [vmem:[%s2 + $0x18] sm:$0xff]
  %v66 = vld [vmem:[%s2 + $0x20] sm:$0xff]
  %v67 = vld [vmem:[%s2 + $0x28] sm:$0xff]
  %v68 = vld [vmem:[%s2 + $0x30] sm:$0xff]
  %v69 = vld [vmem:[%s2 + $0x38] sm:$0xff]
  %v70 = vld [vmem:[%s2 + $0x40] sm:$0xff]
  %v71 = vld [vmem:[%s2 + $0x48] sm:$0xff]
  %v72 = vld [vmem:[%s2 + $0x50] sm:$0xff]
  %v73 = vld [vmem:[%s2 + $0x58] sm:$0xff]
  %v74 = vld [vmem:[%s2 + $0x60] sm:$0xff]
  %v75 = vld [vmem:[%s2 + $0x68] sm:$0xff]
  %v76 = vld [vmem:[%s2 + $0x70] sm:$0xff]
  %v77 = vld [vmem:[%s2 + $0x78] sm:$0xff]
  %v78 = vld [vmem:[%s2 + $0x80] sm:$0xff]
  %v79 = vld [vmem:[%s2 + $0x88] sm:$0xff]
  %81 = vset.pattern.permute.xlu0 0
  %82 = vperm.xlu0 %81, %v62
  %v83 = vpop.permute.xlu0 %82
  %86 = vset.pattern.permute.xlu0 0
  %87 = vperm.xlu0 %86, %v63
  %v88 = vpop.permute.xlu0 %87
  %91 = vset.pattern.permute.xlu0 0
  %92 = vperm.xlu0 %91, %v64
  %v93 = vpop.permute.xlu0 %92
  %96 = vset.pattern.permute.xlu0 0
  %97 = vperm.xlu0 %96, %v65
  %v98 = vpop.permute.xlu0 %97
  %101 = vset.pattern.permute.xlu0 0
  %102 = vperm.xlu0 %101, %v66
  %v103 = vpop.permute.xlu0 %102
  %106 = vset.pattern.permute.xlu0 0
  %107 = vperm.xlu0 %106, %v67
  %v108 = vpop.permute.xlu0 %107
  %111 = vset.pattern.permute.xlu0 0
  %112 = vperm.xlu0 %111, %v68
  %v113 = vpop.permute.xlu0 %112
  %116 = vset.pattern.permute.xlu0 0
  %117 = vperm.xlu0 %116, %v69
  %v118 = vpop.permute.xlu0 %117
  %121 = vset.pattern.permute.xlu0 0
  %122 = vperm.xlu0 %121, %v70
  %v123 = vpop.permute.xlu0 %122
  %126 = vset.pattern.permute.xlu0 0
  %127 = vperm.xlu0 %126, %v71
  %v128 = vpop.permute.xlu0 %127
  %131 = vset.pattern.permute.xlu0 0
  %132 = vperm.xlu0 %131, %v72
  %v133 = vpop.permute.xlu0 %132
  %136 = vset.pattern.permute.xlu0 0
  %137 = vperm.xlu0 %136, %v73
  %v138 = vpop.permute.xlu0 %137
  %141 = vset.pattern.permute.xlu0 0
  %142 = vperm.xlu0 %141, %v74
  %v143 = vpop.permute.xlu0 %142
  %146 = vset.pattern.permute.xlu0 0
  %147 = vperm.xlu0 %146, %v75
  %v148 = vpop.permute.xlu0 %147
  %151 = vset.pattern.permute.xlu0 0
  %152 = vperm.xlu0 %151, %v76
  %v153 = vpop.permute.xlu0 %152
  %156 = vset.pattern.permute.xlu0 0
  %157 = vperm.xlu0 %156, %v77
  %v158 = vpop.permute.xlu0 %157
  %161 = vset.pattern.permute.xlu0 0
  %162 = vperm.xlu0 %161, %v78
  %v163 = vpop.permute.xlu0 %162
  %166 = vset.pattern.permute.xlu0 0
  %167 = vperm.xlu0 %166, %v79
  %v168 = vpop.permute.xlu0 %167
  %vm170 = vcmask 261120
  %v172 = vsel %vm170, %v28, 0
  %v175 = vsel %vm170, %v29, 0
  %v178 = vsel %vm170, %v30, 0
  %v181 = vsel %vm170, %v31, 0
  %v184 = vsel %vm170, %v32, 0
  %v187 = vsel %vm170, %v33, 0
  %v190 = vsel %vm170, %v34, 0
  %v193 = vsel %vm170, %v35, 0
  %v196 = vsel %vm170, %v36, 0
  %v199 = vsel %vm170, %v37, 0
  %v202 = vsel %vm170, %v38, 0
  %v205 = vsel %vm170, %v39, 0
  %v208 = vsel %vm170, %v40, 0
  %v211 = vsel %vm170, %v41, 0
  %v214 = vsel %vm170, %v42, 0
  %v217 = vsel %vm170, %v43, 0
  %v220 = vsel %vm170, %v44, 0
  %v223 = vsel %vm170, %v45, 0
  %v226 = vsel %vm170, %v46, 0
  %v229 = vsel %vm170, %v47, 0
  %v232 = vsel %vm170, %v48, 0
  %v235 = vsel %vm170, %v49, 0
  %v238 = vsel %vm170, %v50, 0
  %v241 = vsel %vm170, %v51, 0
  %v244 = vsel %vm170, %v52, 0
  %v247 = vsel %vm170, %v53, 0
  %v250 = vsel %vm170, %v54, 0
  %v253 = vsel %vm170, %v55, 0
  %v256 = vsel %vm170, %v56, 0
  %v259 = vsel %vm170, %v57, 0
  %v262 = vsel %vm170, %v58, 0
  %v265 = vsel %vm170, %v59, 0
  %v268 = vsel %vm170, %v60, 0
  %v271 = vsel %vm170, %v61, 0
  %273 = vmatpush.xpose.msra.mxu0 %v271
  %274 = vmatpush.xpose.msra.mxu0 %v268
  %275 = vmatpush.xpose.msra.mxu0 %v265
  %276 = vmatpush.xpose.msra.mxu0 %v262
  %277 = vmatpush.xpose.msra.mxu0 %v259
  %278 = vmatpush.xpose.msra.mxu0 %v256
  %279 = vmatpush.xpose.msra.mxu0 %v253
  %280 = vmatpush.xpose.msra.mxu0 %v250
  %281 = vmatpush.xpose.msra.mxu0 %v247
  %282 = vmatpush.xpose.msra.mxu0 %v244
  %283 = vmatpush.xpose.msra.mxu0 %v241
  %284 = vmatpush.xpose.msra.mxu0 %v238
  %285 = vmatpush.xpose.msra.mxu0 %v235
  %286 = vmatpush.xpose.msra.mxu0 %v232
  %287 = vmatpush.xpose.msra.mxu0 %v229
  %288 = vmatpush.xpose.msra.mxu0 %v226
  %289 = vmatmul.f32.gmra.mxu0 %v172
  %v290 = vpop.f32.mrf.mxu0
  %v291 = vadd.f32 %v83, %v290
  %292 = vmatmul.f32.gmra.mxu0 %v175
  %v293 = vpop.f32.mrf.mxu0
  %v294 = vadd.f32 %v88, %v293
  %295 = vmatmul.f32.gmra.mxu0 %v178
  %v296 = vpop.f32.mrf.mxu0
  %v297 = vadd.f32 %v93, %v296
  %298 = vmatmul.f32.gmra.mxu0 %v181
  %v299 = vpop.f32.mrf.mxu0
  %v300 = vadd.f32 %v98, %v299
  %301 = vmatmul.f32.gmra.mxu0 %v184
  %v302 = vpop.f32.mrf.mxu0
  %v303 = vadd.f32 %v103, %v302
  %304 = vmatmul.f32.gmra.mxu0 %v187
  %v305 = vpop.f32.mrf.mxu0
  %v306 = vadd.f32 %v108, %v305
  %307 = vmatmul.f32.gmra.mxu0 %v190
  %v308 = vpop.f32.mrf.mxu0
  %v309 = vadd.f32 %v113, %v308
  %310 = vmatmul.f32.gmra.mxu0 %v193
  %v311 = vpop.f32.mrf.mxu0
  %v312 = vadd.f32 %v118, %v311
  %313 = vmatmul.f32.gmra.mxu0 %v196
  %v314 = vpop.f32.mrf.mxu0
  %v315 = vadd.f32 %v123, %v314
  %316 = vmatmul.f32.gmra.mxu0 %v199
  %v317 = vpop.f32.mrf.mxu0
  %v318 = vadd.f32 %v128, %v317
  %319 = vmatmul.f32.gmra.mxu0 %v202
  %v320 = vpop.f32.mrf.mxu0
  %v321 = vadd.f32 %v133, %v320
  %322 = vmatmul.f32.gmra.mxu0 %v205
  %v323 = vpop.f32.mrf.mxu0
  %v324 = vadd.f32 %v138, %v323
  %325 = vmatmul.f32.gmra.mxu0 %v208
  %v326 = vpop.f32.mrf.mxu0
  %v327 = vadd.f32 %v143, %v326
  %328 = vmatmul.f32.gmra.mxu0 %v211
  %v329 = vpop.f32.mrf.mxu0
  %v330 = vadd.f32 %v148, %v329
  %331 = vmatmul.f32.gmra.mxu0 %v214
  %v332 = vpop.f32.mrf.mxu0
  %v333 = vadd.f32 %v153, %v332
  %334 = vmatmul.f32.gmra.mxu0 %v217
  %v335 = vpop.f32.mrf.mxu0
  %v336 = vadd.f32 %v158, %v335
  %337 = vmatmul.f32.gmra.mxu0 %v220
  %v338 = vpop.f32.mrf.mxu0
  %v339 = vadd.f32 %v163, %v338
  %340 = vmatmul.f32.gmra.mxu0 %v223
  %v341 = vpop.f32.mrf.mxu0
  %v342 = vadd.f32 %v168, %v341
  %343 = vdwg.mxu0
  %v344 = vmax.f32 %v291, 0.0
  %v345 = vmax.f32 %v294, 0.0
  %v346 = vmax.f32 %v297, 0.0
  %v347 = vmax.f32 %v300, 0.0
  %v348 = vmax.f32 %v303, 0.0
  %v349 = vmax.f32 %v306, 0.0
  %v350 = vmax.f32 %v309, 0.0
  %v351 = vmax.f32 %v312, 0.0
  %v352 = vmax.f32 %v315, 0.0
  %v353 = vmax.f32 %v318, 0.0
  %v354 = vmax.f32 %v321, 0.0
  %v355 = vmax.f32 %v324, 0.0
  %v356 = vmax.f32 %v327, 0.0
  %v357 = vmax.f32 %v330, 0.0
  %v358 = vmax.f32 %v333, 0.0
  %v359 = vmax.f32 %v336, 0.0
  %v360 = vmax.f32 %v339, 0.0
  %v361 = vmax.f32 %v342, 0.0
  %v362 = vld [vmem:[%s3] sm:$0xff]
  %v363 = vld [vmem:[%s3 + $0x8] sm:$0xff]
  %v364 = vld [vmem:[%s3 + $0x10] sm:$0xff]
  %v365 = vld [vmem:[%s3 + $0x18] sm:$0xff]
  %v366 = vld [vmem:[%s3 + $0x20] sm:$0xff]
  %v367 = vld [vmem:[%s3 + $0x28] sm:$0xff]
  %v368 = vld [vmem:[%s3 + $0x30] sm:$0xff]
  %v369 = vld [vmem:[%s3 + $0x38] sm:$0xff]
  %v370 = vld [vmem:[%s3 + $0x40] sm:$0xff]
  %v371 = vld [vmem:[%s3 + $0x48] sm:$0xff]
  %v372 = vld [vmem:[%s3 + $0x50] sm:$0xff]
  %v373 = vld [vmem:[%s3 + $0x58] sm:$0xff]
  %v374 = vld [vmem:[%s3 + $0x60] sm:$0xff]
  %v375 = vld [vmem:[%s3 + $0x68] sm:$0xff]
  %v376 = vld [vmem:[%s3 + $0x70] sm:$0xff]
  %v377 = vld [vmem:[%s3 + $0x78] sm:$0xff]
  %v378 = vld [vmem:[%s3 + $0x80] sm:$0xff]
  %v379 = vld [vmem:[%s3 + $0x88] sm:$0xff]
  %v380 = vld [vmem:[%s4] sm:$0xff]
  %v381 = vld [vmem:[%s4 + $0x8] sm:$0xff]
  %v382 = vld [vmem:[%s4 + $0x10] sm:$0xff]
  %v383 = vld [vmem:[%s4 + $0x18] sm:$0xff]
  %v384 = vld [vmem:[%s4 + $0x20] sm:$0xff]
  %v385 = vld [vmem:[%s4 + $0x28] sm:$0xff]
  %v386 = vld [vmem:[%s4 + $0x30] sm:$0xff]
  %v387 = vld [vmem:[%s4 + $0x38] sm:$0xff]
  %v388 = vld [vmem:[%s4 + $0x40] sm:$0xff]
  %390 = vset.pattern.permute.xlu0 0
  %391 = vperm.xlu0 %390, %v380
  %v392 = vpop.permute.xlu0 %391
  %395 = vset.pattern.permute.xlu0 0
  %396 = vperm.xlu0 %395, %v381
  %v397 = vpop.permute.xlu0 %396
  %400 = vset.pattern.permute.xlu0 0
  %401 = vperm.xlu0 %400, %v382
  %v402 = vpop.permute.xlu0 %401
  %405 = vset.pattern.permute.xlu0 0
  %406 = vperm.xlu0 %405, %v383
  %v407 = vpop.permute.xlu0 %406
  %410 = vset.pattern.permute.xlu0 0
  %411 = vperm.xlu0 %410, %v384
  %v412 = vpop.permute.xlu0 %411
  %415 = vset.pattern.permute.xlu0 0
  %416 = vperm.xlu0 %415, %v385
  %v417 = vpop.permute.xlu0 %416
  %420 = vset.pattern.permute.xlu0 0
  %421 = vperm.xlu0 %420, %v386
  %v422 = vpop.permute.xlu0 %421
  %425 = vset.pattern.permute.xlu0 0
  %426 = vperm.xlu0 %425, %v387
  %v427 = vpop.permute.xlu0 %426
  %430 = vset.pattern.permute.xlu0 0
  %431 = vperm.xlu0 %430, %v388
  %v432 = vpop.permute.xlu0 %431
  %vm434 = vcmask 130048
  %v436 = vsel %vm434, %v363, 0
  %v439 = vsel %vm434, %v365, 0
  %v442 = vsel %vm434, %v367, 0
  %v445 = vsel %vm434, %v369, 0
  %v448 = vsel %vm434, %v371, 0
  %v451 = vsel %vm434, %v373, 0
  %v454 = vsel %vm434, %v375, 0
  %v457 = vsel %vm434, %v377, 0
  %v460 = vsel %vm434, %v379, 0
  %462 = vmatpush.msra.mxu0 %v359
  %463 = vmatpush.msra.mxu0 %v358
  %464 = vmatpush.msra.mxu0 %v357
  %465 = vmatpush.msra.mxu0 %v356
  %466 = vmatpush.msra.mxu0 %v355
  %467 = vmatpush.msra.mxu0 %v354
  %468 = vmatpush.msra.mxu0 %v353
  %469 = vmatpush.msra.mxu0 %v352
  %470 = vmatpush.msra.mxu0 %v351
  %471 = vmatpush.msra.mxu0 %v350
  %472 = vmatpush.msra.mxu0 %v349
  %473 = vmatpush.msra.mxu0 %v348
  %474 = vmatpush.msra.mxu0 %v347
  %475 = vmatpush.msra.mxu0 %v346
  %476 = vmatpush.msra.mxu0 %v345
  %477 = vmatpush.msra.mxu0 %v344
  %478 = vmatmul.f32.gmra.mxu0 %v362
  %v479 = vpop.f32.mrf.mxu0
  %v480 = vadd.f32 %v392, %v479
  %481 = vmatmul.f32.gmra.mxu0 %v364
  %v482 = vpop.f32.mrf.mxu0
  %v483 = vadd.f32 %v397, %v482
  %484 = vmatmul.f32.gmra.mxu0 %v366
  %v485 = vpop.f32.mrf.mxu0
  %v486 = vadd.f32 %v402, %v485
  %487 = vmatmul.f32.gmra.mxu0 %v368
  %v488 = vpop.f32.mrf.mxu0
  %v489 = vadd.f32 %v407, %v488
  %490 = vmatmul.f32.gmra.mxu0 %v370
  %v491 = vpop.f32.mrf.mxu0
  %v492 = vadd.f32 %v412, %v491
  %493 = vmatmul.f32.gmra.mxu0 %v372
  %v494 = vpop.f32.mrf.mxu0
  %v495 = vadd.f32 %v417, %v494
  %496 = vmatmul.f32.gmra.mxu0 %v374
  %v497 = vpop.f32.mrf.mxu0
  %v498 = vadd.f32 %v422, %v497
  %499 = vmatmul.f32.gmra.mxu0 %v376
  %v500 = vpop.f32.mrf.mxu0
  %v501 = vadd.f32 %v427, %v500
  %502 = vmatmul.f32.gmra.mxu0 %v378
  %v503 = vpop.f32.mrf.mxu0
  %v504 = vadd.f32 %v432, %v503
  %505 = vdwg.mxu0
  %506 = vmatpush.msra.mxu0 0.0
  %507 = vmatpush.msra.mxu0 0.0
  %508 = vmatpush.msra.mxu0 0.0
  %509 = vmatpush.msra.mxu0 0.0
  %510 = vmatpush.msra.mxu0 0.0
  %511 = vmatpush.msra.mxu0 0.0
  %512 = vmatpush.msra.mxu0 0.0
  %513 = vmatpush.msra.mxu0 0.0
  %514 = vmatpush.msra.mxu0 0.0
  %515 = vmatpush.msra.mxu0 0.0
  %516 = vmatpush.msra.mxu0 0.0
  %517 = vmatpush.msra.mxu0 0.0
  %518 = vmatpush.msra.mxu0 0.0
  %519 = vmatpush.msra.mxu0 0.0
  %520 = vmatpush.msra.mxu0 %v361
  %521 = vmatpush.msra.mxu0 %v360
  %522 = vmatmul.f32.gmra.mxu0 %v436
  %v523 = vpop.f32.mrf.mxu0
  %v524 = vadd.f32 %v480, %v523
  %525 = vmatmul.f32.gmra.mxu0 %v439
  %v526 = vpop.f32.mrf.mxu0
  %v527 = vadd.f32 %v483, %v526
  %528 = vmatmul.f32.gmra.mxu0 %v442
  %v529 = vpop.f32.mrf.mxu0
  %v530 = vadd.f32 %v486, %v529
  %531 = vmatmul.f32.gmra.mxu0 %v445
  %v532 = vpop.f32.mrf.mxu0
  %v533 = vadd.f32 %v489, %v532
  %534 = vmatmul.f32.gmra.mxu0 %v448
  %v535 = vpop.f32.mrf.mxu0
  %v536 = vadd.f32 %v492, %v535
  %537 = vmatmul.f32.gmra.mxu0 %v451
  %v538 = vpop.f32.mrf.mxu0
  %v539 = vadd.f32 %v495, %v538
  %540 = vmatmul.f32.gmra.mxu0 %v454
  %v541 = vpop.f32.mrf.mxu0
  %v542 = vadd.f32 %v498, %v541
  %543 = vmatmul.f32.gmra.mxu0 %v457
  %v544 = vpop.f32.mrf.mxu0
  %v545 = vadd.f32 %v501, %v544
  %546 = vmatmul.f32.gmra.mxu0 %v460
  %v547 = vpop.f32.mrf.mxu0
  %v548 = vadd.f32 %v504, %v547
  %549 = vdwg.mxu0
  %v550 = vmax.f32 %v524, 0.0
  %v551 = vmax.f32 %v527, 0.0
  %v552 = vmax.f32 %v530, 0.0
  %v553 = vmax.f32 %v533, 0.0
  %v554 = vmax.f32 %v536, 0.0
  %v555 = vmax.f32 %v539, 0.0
  %v556 = vmax.f32 %v542, 0.0
  %v557 = vmax.f32 %v545, 0.0
  %v558 = vmax.f32 %v548, 0.0
  %v559 = vld [vmem:[%s5] sm:$0xff]
  %v560 = vld [vmem:[%s5 + $0x8] sm:$0xff]
  %v561 = vld [vmem:[%s5 + $0x10] sm:$0xff]
  %v562 = vld [vmem:[%s5 + $0x18] sm:$0xff]
  %v563 = vld [vmem:[%s5 + $0x20] sm:$0xff]
  %v564 = vld [vmem:[%s5 + $0x28] sm:$0xff]
  %v565 = vld [vmem:[%s5 + $0x30] sm:$0xff]
  %v566 = vld [vmem:[%s5 + $0x38] sm:$0xff]
  %v567 = vld [vmem:[%s5 + $0x40] sm:$0xff]
  %569 = vset.pattern.permute.xlu0 0
  %570 = vperm.xlu0 %569, %v559
  %v571 = vpop.permute.xlu0 %570
  %574 = vset.pattern.permute.xlu0 0
  %575 = vperm.xlu0 %574, %v560
  %v576 = vpop.permute.xlu0 %575
  %579 = vset.pattern.permute.xlu0 0
  %580 = vperm.xlu0 %579, %v561
  %v581 = vpop.permute.xlu0 %580
  %584 = vset.pattern.permute.xlu0 0
  %585 = vperm.xlu0 %584, %v562
  %v586 = vpop.permute.xlu0 %585
  %589 = vset.pattern.permute.xlu0 0
  %590 = vperm.xlu0 %589, %v563
  %v591 = vpop.permute.xlu0 %590
  %594 = vset.pattern.permute.xlu0 0
  %595 = vperm.xlu0 %594, %v564
  %v596 = vpop.permute.xlu0 %595
  %599 = vset.pattern.permute.xlu0 0
  %600 = vperm.xlu0 %599, %v565
  %v601 = vpop.permute.xlu0 %600
  %604 = vset.pattern.permute.xlu0 0
  %605 = vperm.xlu0 %604, %v566
  %v606 = vpop.permute.xlu0 %605
  %609 = vset.pattern.permute.xlu0 0
  %610 = vperm.xlu0 %609, %v567
  %v611 = vpop.permute.xlu0 %610
  %v613 = vmul.f32 %v550, %v571
  %v614 = vmul.f32 %v551, %v576
  %v615 = vmul.f32 %v552, %v581
  %v616 = vmul.f32 %v553, %v586
  %v617 = vmul.f32 %v554, %v591
  %v618 = vmul.f32 %v555, %v596
  %v619 = vmul.f32 %v556, %v601
  %v620 = vmul.f32 %v557, %v606
  %v621 = vmul.f32 %v558, %v611
  %v622 = vadd.f32 %v613, %v614
  %v623 = vadd.f32 %v622, %v615
  %v624 = vadd.f32 %v623, %v616
  %v625 = vadd.f32 %v624, %v617
  %v626 = vadd.f32 %v625, %v618
  %v627 = vadd.f32 %v626, %v619
  %v628 = vadd.f32 %v627, %v620
  %v629 = vadd.f32 %v628, %v621
  %v630 = vrot.slane %v629, 4
  %v631 = vadd.f32 %v629, %v630
  %v632 = vrot.slane %v631, 2
  %v633 = vadd.f32 %v631, %v632
  %v634 = vrot.slane %v633, 1
  %v635 = vadd.f32 %v633, %v634
  %v636 = vld [vmem:[#allocation2] sm:$0x1]
  %638 = vset.pattern.permute.xlu0 0
  %639 = vperm.xlu0 %638, %v636
  %v640 = vpop.permute.xlu0 %639
  %v642 = vperm.slane %v640, 0
  %v643 = vadd.f32 %v635, %v642
  %v644 = vmax.f32 %v643, 0.0
  %645 = vst [vmem:[%s7] sm:$0x1] %v644
  // Predicated region
  $region30: #{regressor_forward.1} parent=0 // pred_check
    _
  $region31: #{regressor_forward.1} parent=0 // pred_check_branch
    %647 = sbr.rel (0) target = $region33
  $region32: #{regressor_forward.1} parent=0 // pred_region
    _
  $region33: #{regressor_forward.1} parent=0 // pred_fallthru
    _
  // Predicated region
  $region34: #{regressor_forward.1} parent=0 // pred_check
    _
  $region35: #{regressor_forward.1} parent=0 // pred_check_branch
    %649 = sbr.rel (0) target = $region37
  $region36: #{regressor_forward.1} parent=0 // pred_region
    _
  $region37: #{regressor_forward.1} parent=0 // pred_fallthru
    _

</llo_original>
